<compile_context>
chip_gen: v6e
topology: v6e:2x2x1
jax: 0.10.0
libtpu: 0.0.40
codegen_flags: <defaults>
</compile_context>

<pallas_src>
import jax
import jax.numpy as jnp
from jax.experimental import pallas as pl
from jax.experimental.pallas import tpu as pltpu

LANES = 128


def _round_up(a, m):
    return -(-a // m) * m


def _linear_kernel(wb_ref, x_ref, o_ref):
    # wb_ref: (2,) f32 in SMEM holding [w, b]; x_ref / o_ref: (tr, 128) VMEM tiles.
    o_ref[...] = x_ref[...] * wb_ref[0] + wb_ref[1]


def linear_forward(x, weight, bias, *, tile_rows=4096, min_pallas_batch=65536):
    """LinearModel forward. x: (N, 1) f32; weight: (1, 1); bias: (1,) -> (N, 1) f32."""
    n, in_f = x.shape
    assert in_f == 1, "LinearModel expects in_features == 1"
    x = x.astype(jnp.float32)
    w = weight.reshape(()).astype(jnp.float32)
    b = bias.reshape(()).astype(jnp.float32)

    # Tiny / empty batches: a fused XLA scale-and-shift beats kernel-launch + pad
    # overhead; the Pallas path only wins once the op is genuinely HBM-bound.
    if n == 0 or n < min_pallas_batch:
        return x * w + b

    rows = -(-n // LANES)                      # ceil(N / 128) slab rows
    aligned = (n % LANES == 0)

    # Pick the row-tile: multiple of 8 (block_shape constraint), <= rows, and small
    # enough that the grid has >= 2 steps when possible (v7x megacore split).
    if rows < 8:
        tr = rows                              # full-array block (allowed: equals dim)
    else:
        tr = min(tile_rows, (rows // 8) * 8)
        if rows >= 16:
            tr = min(tr, _round_up(-(-rows // 2), 8))
        tr = max(8, (tr // 8) * 8)

    # Lane-dense layout: view (N, 1) as a (rows, 128) slab.  Aligned N needs no pad
    # (zero-copy reshape); unaligned N pads only the < 128-element tail.
    if aligned:
        x_slab = x.reshape(rows, LANES)
    else:
        x_slab = jnp.pad(x.reshape(-1), (0, rows * LANES - n)).reshape(rows, LANES)

    wb = jnp.stack([w, b])                     # (2,) scalar params for SMEM

    y_slab = pl.pallas_call(
        _linear_kernel,
        out_shape=jax.ShapeDtypeStruct((rows, LANES), jnp.float32),
        grid=(pl.cdiv(rows, tr),),
        in_specs=[
            pl.BlockSpec(memory_space=pltpu.MemorySpace.SMEM),
            pl.BlockSpec((tr, LANES), lambda i: (i, 0)),
        ],
        out_specs=pl.BlockSpec((tr, LANES), lambda i: (i, 0)),
        compiler_params=pltpu.CompilerParams(
            dimension_semantics=("parallel",)),
    )(wb, x_slab)

    if aligned:
        return y_slab.reshape(n, 1)            # zero-copy: no tail slice
    return y_slab.reshape(-1)[:n].reshape(n, 1)


if __name__ == "__main__":
    key = jax.random.PRNGKey(0)
    kx, kw, kb, kx2, kx3 = jax.random.split(key, 5)

    # Parameter init mirroring nn.Linear(1, 1): U(-1, 1) since 1/sqrt(in_features)=1.
    weight = jax.random.uniform(kw, (1, 1), jnp.float32, minval=-1.0, maxval=1.0)
    bias = jax.random.uniform(kb, (1,), jnp.float32, minval=-1.0, maxval=1.0)

    # 1) Small input consistent with the module: batch=8, in_features=1.
    #    Force the Pallas path (min_pallas_batch=0) to exercise the kernel.
    x = jax.random.normal(kx, (8, 1), jnp.float32)
    y = jax.block_until_ready(linear_forward(x, weight, bias, min_pallas_batch=0))
    y_ref = x @ weight.T + bias
    assert y.shape == (8, 1)
    assert jnp.allclose(y, y_ref, atol=1e-6, rtol=1e-6)

    # 2) Unaligned batch + multi-tile grid with a ragged last block.
    x2 = jax.random.normal(kx2, (2000, 1), jnp.float32)
    y2 = jax.block_until_ready(
        linear_forward(x2, weight, bias, tile_rows=8, min_pallas_batch=0))
    y2_ref = x2 @ weight.T + bias
    assert y2.shape == (2000, 1)
    assert jnp.allclose(y2, y2_ref, atol=1e-6, rtol=1e-6)

    # 3) Lane-aligned batch: no pad, no tail slice, 2-step parallel grid.
    x3 = jax.random.normal(kx3, (4096, 1), jnp.float32)
    y3 = jax.block_until_ready(linear_forward(x3, weight, bias, min_pallas_batch=0))
    y3_ref = x3 @ weight.T + bias
    assert y3.shape == (4096, 1)
    assert jnp.allclose(y3, y3_ref, atol=1e-6, rtol=1e-6)

    # 4) Tiny-batch fast path (default min_pallas_batch) stays correct too.
    y4 = jax.block_until_ready(linear_forward(x, weight, bias))
    assert jnp.allclose(y4, y_ref, atol=1e-6, rtol=1e-6)

    print("KERNEL_OK")
</pallas_src>

<mosaic_0001>
module attributes {stable_mosaic.version = 11 : i64} {
  func.func @_linear_kernel(%arg0: i32, %arg1: memref<2xf32, #tpu.memory_space<smem>>, %arg2: memref<1x128xf32, #tpu.memory_space<vmem>>, %arg3: memref<1x128xf32, #tpu.memory_space<vmem>>) attributes {dimension_semantics = [#tpu.dimension_semantics<parallel>], iteration_bounds = array<i64: 1>, scalar_prefetch = 0 : i64, scratch_operands = 0 : i64, tpu.core_type = #tpu.core_type<tc>, window_params = [{transform_indices = @transform_0, window_bounds = array<i64: 2>}, {transform_indices = @transform_1, window_bounds = array<i64: 1, 128>}, {transform_indices = @transform_2, window_bounds = array<i64: 1, 128>}]} {
    %c0 = arith.constant 0 : index
    %c0_0 = arith.constant 0 : index
    %0 = vector.load %arg2[%c0, %c0_0] : memref<1x128xf32, #tpu.memory_space<vmem>>, vector<1x128xf32>
    %c0_1 = arith.constant 0 : index
    %1 = memref.load %arg1[%c0_1] : memref<2xf32, #tpu.memory_space<smem>>
    %2 = vector.broadcast %1 : f32 to vector<1x128xf32>
    %3 = arith.mulf %0, %2 : vector<1x128xf32>
    %c1 = arith.constant 1 : index
    %4 = memref.load %arg1[%c1] : memref<2xf32, #tpu.memory_space<smem>>
    %5 = vector.broadcast %4 : f32 to vector<1x128xf32>
    %6 = arith.addf %3, %5 : vector<1x128xf32>
    %c0_2 = arith.constant 0 : index
    %c0_3 = arith.constant 0 : index
    %7 = vector.load %arg3[%c0_2, %c0_3] : memref<1x128xf32, #tpu.memory_space<vmem>>, vector<1x128xf32>
    tpu.vector_store %arg3[%c0_2, %c0_3], %6 {strides = array<i32>} : memref<1x128xf32, #tpu.memory_space<vmem>>, vector<1x128xf32>,
    return
  }
  func.func @transform_0(%arg0: i32) -> i32 {
    %c0_i32 = arith.constant 0 : i32
    %c0_i32_0 = arith.constant 0 : i32
    return %c0_i32 : i32
  }
  func.func @transform_1(%arg0: i32) -> (i32, i32) {
    %c0_i32 = arith.constant 0 : i32
    %c0_i32_0 = arith.constant 0 : i32
    return %arg0, %c0_i32 : i32, i32
  }
  func.func @transform_2(%arg0: i32) -> (i32, i32) {
    %c0_i32 = arith.constant 0 : i32
    %c0_i32_0 = arith.constant 0 : i32
    return %arg0, %c0_i32 : i32, i32
  }
}

</mosaic_0001>

<llo_original>
// kernel: tpu_custom_call.1
$region0: #{tpu_custom_call.1}
  #allocation0 [shape = 'u32[]', space=smem, size = 0x4, offset = 0x4, fixed_abs, tag = 'smem constant byte address 0x4 - core index']
  #allocation1 [shape = 'u32[144,128]{1,0:T(1,128)}', space=vmem, size = 0x12000, scoped, tag = 'internal scratch']
  %s0 = inlined_call_operand.hbm [shape: f32[2], index: 0, kind: input, shape index: {}]
  %s1 = inlined_call_operand.vmem [shape: f32[1,128], index: 1, kind: input, shape index: {}]
  %s2 = inlined_call_operand.hbm [shape: f32[1,128], index: 2, kind: output, shape index: {}]
  %s3 = sld [smem:[#allocation0]]
  $region22: #{tpu_custom_call.1} parent=0
    _
  %s5 = ssub.s32 1, %s3
  %s6 = scalar_select 0, %s5, %s3
  $region1: #{tpu_custom_call.1} parent=0
    #allocation2 [shape = 'u8[512]{0}', space=smem, size = 0x200, scoped, tag = 'input window, operand 0, single buffered']
    #allocation3 [shape = 's32[1]{0}', space=sflag, size = 0x4, scoped, tag = 'scoped memory for tpu_custom_call.1']
    #allocation4 [shape = 's32[1]{0}', space=sflag, size = 0x4, scoped, tag = 'scoped memory for tpu_custom_call.1']
    #allocation5 [shape = 'u8[512]{0}', space=vmem, size = 0x400, scoped, tag = 'output window, operand 0, single buffered']
    %7 = vsyncpa [#allocation4], 0
    %8 = vsyncpa [#allocation3], 0
    // Predicated region
    $region2: #{tpu_custom_call.1} parent=1 // pred_check
      _
    $region3: #{tpu_custom_call.1} parent=1 // pred_check_branch
      %10 = sbr.rel (0) target = $region5
    $region4: #{tpu_custom_call.1} parent=1 // pred_region
      %s12 = ssub.s32 16, 16
      %13 = vsyncadd [#allocation4], %s12
      %16 = dma.hbm_to_smem %s0, 16, [#allocation2], [#allocation4]
    $region5: #{tpu_custom_call.1} parent=1 // pred_fallthru
      _
    // Predicated region
    $region6: #{tpu_custom_call.1} parent=1 // pred_check
      _
    $region7: #{tpu_custom_call.1} parent=1 // pred_check_branch
      %18 = sbr.rel (0) target = $region9
    $region8: #{tpu_custom_call.1} parent=1 // pred_region
      _
    $region9: #{tpu_custom_call.1} parent=1 // pred_fallthru
      _
    // Predicated region
    $region10: #{tpu_custom_call.1} parent=1 // pred_check
      _
    $region11: #{tpu_custom_call.1} parent=1 // pred_check_branch
      %20 = sbr.rel (0) target = $region13
    $region12: #{tpu_custom_call.1} parent=1 // pred_region
      %21 = dma.done [#allocation4], 16
    $region13: #{tpu_custom_call.1} parent=1 // pred_fallthru
      _
    %22 = sfence
    %v23 = vld [vmem:[%s1] sm:$0x1]
    %s24 = sld [smem:[#allocation2]]
    %v25 = vstv %s24
    %v26 = vmul.f32 %v23, %v25
    %s27 = sld [smem:[#allocation2 + $0x1]]
    %v28 = vstv %s27
    %v29 = vadd.f32 %v26, %v28
    %30 = vst [vmem:[#allocation5] sm:$0x1] %v29
    // Predicated region
    $region14: #{tpu_custom_call.1} parent=1 // pred_check
      _
    $region15: #{tpu_custom_call.1} parent=1 // pred_check_branch
      %32 = sbr.rel (0) target = $region17
    $region16: #{tpu_custom_call.1} parent=1 // pred_region
      %s34 = ssub.s32 16, 16
      %35 = vsyncadd [#allocation3], %s34
      %s37 = sshll.u32 [#allocation5], 4
      %s38 = int_to_ptr.vmem [resolvable:$true] %s37
      %40 = dma.vmem_to_hbm [thread:$0]  %s38, 16, %s2, [#allocation3]
    $region17: #{tpu_custom_call.1} parent=1 // pred_fallthru
      _
    // Predicated region
    $region18: #{tpu_custom_call.1} parent=1 // pred_check
      _
    $region19: #{tpu_custom_call.1} parent=1 // pred_check_branch
      %42 = sbr.rel (0) target = $region21
    $region20: #{tpu_custom_call.1} parent=1 // pred_region
      %43 = dma.done [#allocation3], 16
    $region21: #{tpu_custom_call.1} parent=1 // pred_fallthru
      _
    %44 = vsyncpa [#allocation3], 1
    %45 = vsyncpa [#allocation4], 1

</llo_original>
